<compile_context>
chip_gen: v6e
topology: v6e:2x2x1
jax: 0.10.0
libtpu: 0.0.40
codegen_flags: <defaults>
</compile_context>

<pallas_src>
import jax
import jax.numpy as jnp
from jax import lax
from jax.experimental import pallas as pl
from jax.experimental.pallas import tpu as pltpu


def _convt_stats_kernel(xm_ref, xe_ref, w_ref, y_ref, stats_ref):
    """Transposed-conv tile: 4 tap matmuls -> lane-dense (R*W, 4*Cout) + partial BN stats."""
    _, R, Wp, Cin = xm_ref.shape
    W = Wp - 1

    xm = xm_ref[0]                                   # (R, Wp, Cin)   rows [tR, tR+R)
    xe = xe_ref[0]                                   # (1, Wp, Cin)   halo row tR+R
    xd = jnp.concatenate([xm[1:], xe], axis=0)       # (R, Wp, Cin)   rows shifted down by 1

    def flat(v):                                     # (R, W, Cin) -> (R*W, Cin)
        return v.reshape(R * W, Cin)

    x00 = flat(xm[:, :W, :])                         # x[r,   c  ]
    x01 = flat(xm[:, 1:, :])                         # x[r,   c+1]  (zero past right edge)
    x10 = flat(xd[:, :W, :])                         # x[r+1, c  ]  (zero past bottom edge)
    x11 = flat(xd[:, 1:, :])                         # x[r+1, c+1]

    # w_ref: (4, Cin, 4*Cout); each tap's weights are zero-padded to the full
    # 4*Cout width so every matmul writes the lane-dense [ee|eo|oe|oo] slab.
    y = jnp.dot(x00, w_ref[0], preferred_element_type=jnp.float32)
    y += jnp.dot(x01, w_ref[1], preferred_element_type=jnp.float32)
    y += jnp.dot(x10, w_ref[2], preferred_element_type=jnp.float32)
    y += jnp.dot(x11, w_ref[3], preferred_element_type=jnp.float32)

    y_ref[0] = y

    # Per-tile partial BatchNorm statistics (kept in f32); reduced in the wrapper.
    ssum = jnp.sum(y, axis=0, keepdims=True)         # (1, 4*Cout)
    ssq = jnp.sum(y * y, axis=0, keepdims=True)      # (1, 4*Cout)
    stats_ref[0, 0] = jnp.concatenate([ssum, ssq], axis=0)


def _bn_relu_kernel(y_ref, scale_ref, shift_ref, o_ref):
    """Fused affine BatchNorm (precomputed per-channel scale/shift) + ReLU."""
    o_ref[...] = jnp.maximum(y_ref[...] * scale_ref[...] + shift_ref[...], 0.0)


def _pick_row_block(H, W, target_rows=2048):
    """Largest divisor R of H with R*W <= target_rows and (R*W) % 8 == 0."""
    for r in range(H, 0, -1):
        if H % r == 0 and r * W <= target_rows and (r * W) % 8 == 0:
            return r
    return H


def upsampler_block(x_nchw, w, b, gamma, beta, eps=1e-3, *, row_block=None,
                    compute_dtype=jnp.float32):
    """Forward of UpsamplerBlock. x_nchw: (N, Cin, H, W) -> (N, Cout, 2H, 2W)."""
    del b  # ConvTranspose2d bias cancels exactly under training-mode BatchNorm.
    N, Cin, H, W = x_nchw.shape
    Cout = w.shape[1]
    Wp = W + 1
    R = row_block if row_block is not None else _pick_row_block(H, W)
    assert H % R == 0, "row_block must divide H"
    assert R == H or (R * W) % 8 == 0, "row tile must be sublane-aligned"
    T = H // R
    C4 = 4 * Cout

    # ---- glue: NCHW -> channels-last, single zero-padded copy (bottom + right).
    x = jnp.transpose(x_nchw, (0, 2, 3, 1)).astype(compute_dtype)
    xp = jnp.pad(x, ((0, 0), (0, 1), (0, 1), (0, 0)))            # (N, H+1, W+1, Cin)

    # ---- weights: fuse the 9 taps into 4 (Cin, 4*Cout) matrices (zero blocks
    # for missing (tap, quadrant) pairs).  PyTorch ConvTranspose2d weight is
    # (Cin, Cout, kH, kW); wt[ky, kx] is the (Cin, Cout) tap matrix.
    wt = jnp.transpose(w, (2, 3, 0, 1)).astype(jnp.float32)      # (3, 3, Cin, Cout)
    z = jnp.zeros((Cin, Cout), jnp.float32)
    w4 = jnp.stack([
        jnp.concatenate([wt[1, 1], wt[1, 2], wt[2, 1], wt[2, 2]], axis=1),  # x00
        jnp.concatenate([z,        wt[1, 0], z,        wt[2, 0]], axis=1),  # x01
        jnp.concatenate([z,        z,        wt[0, 1], wt[0, 2]], axis=1),  # x10
        jnp.concatenate([z,        z,        z,        wt[0, 0]], axis=1),  # x11
    ]).astype(compute_dtype)                                     # (4, Cin, 4*Cout)

    cparams = pltpu.CompilerParams(
        dimension_semantics=("parallel", "parallel"),
        vmem_limit_bytes=32 * 1024 * 1024)

    # ---- kernel 1: transposed conv (quadrants folded into channels) + BN stats.
    y_flat, stats = pl.pallas_call(
        _convt_stats_kernel,
        out_shape=(jax.ShapeDtypeStruct((N, H * W, C4), jnp.float32),
                   jax.ShapeDtypeStruct((N, T, 2, C4), jnp.float32)),
        grid_spec=pltpu.PrefetchScalarGridSpec(
            num_scalar_prefetch=0,
            grid=(N, T),
            in_specs=[
                # rows [t*R, t*R + R) of the padded image
                pl.BlockSpec((1, R, Wp, Cin), lambda n, t: (n, t, 0, 0)),
                # halo row t*R + R (always in bounds: padded image has H+1 rows)
                pl.BlockSpec((1, 1, Wp, Cin), lambda n, t: (n, (t + 1) * R, 0, 0)),
                pl.BlockSpec((4, Cin, C4), lambda n, t: (0, 0, 0)),
            ],
            out_specs=(pl.BlockSpec((1, R * W, C4), lambda n, t: (n, t, 0)),
                       pl.BlockSpec((1, 1, 2, C4), lambda n, t: (n, t, 0, 0))),
        ),
        compiler_params=cparams,
    )(xp, xp, w4)

    # ---- BatchNorm (training-mode forward: biased batch statistics) folded into
    # per-channel scale/shift.  Stats reduction is tiny (N*T*2*4*Cout elements).
    s = jnp.sum(stats, axis=(0, 1)).reshape(2, 4, Cout).sum(axis=1)   # (2, Cout)
    count = jnp.float32(N * 4 * H * W)                                # = N*(2H)*(2W)
    mean = s[0] / count
    var = s[1] / count - mean * mean
    scale = gamma.astype(jnp.float32) / jnp.sqrt(var + eps)
    shift = beta.astype(jnp.float32) - mean * scale
    scale4 = jnp.tile(scale, 4).reshape(1, 1, C4)
    shift4 = jnp.tile(shift, 4).reshape(1, 1, C4)

    # ---- kernel 2: fused affine BN + ReLU on the lane-dense layout.
    out_flat = pl.pallas_call(
        _bn_relu_kernel,
        out_shape=jax.ShapeDtypeStruct((N, H * W, C4), jnp.float32),
        grid_spec=pltpu.PrefetchScalarGridSpec(
            num_scalar_prefetch=0,
            grid=(N, T),
            in_specs=[pl.BlockSpec((1, R * W, C4), lambda n, t: (n, t, 0)),
                      pl.BlockSpec((1, 1, C4), lambda n, t: (0, 0, 0)),
                      pl.BlockSpec((1, 1, C4), lambda n, t: (0, 0, 0))],
            out_specs=pl.BlockSpec((1, R * W, C4), lambda n, t: (n, t, 0)),
        ),
        compiler_params=cparams,
    )(y_flat, scale4, shift4)

    # ---- glue: quadrant de-interleave fused with the NCHW output transpose
    # (a single XLA copy pass; the reshapes are free/contiguous).
    out = out_flat.reshape(N, H, W, 2, 2, Cout)          # (n, h, w, py, px, co)
    out = jnp.transpose(out, (0, 5, 1, 3, 2, 4))         # (n, co, h, py, w, px)
    return out.reshape(N, Cout, 2 * H, 2 * W)
    # TODO(synk): eval-mode BN (running stats) not modeled; module default is training mode.


def reference(x, w, b, gamma, beta, eps=1e-3):
    """Pure-JAX reference matching the PyTorch forward (training-mode BN)."""
    w_conv = jnp.transpose(w[:, :, ::-1, ::-1], (1, 0, 2, 3))  # (Cout, Cin, 3, 3)
    y = lax.conv_general_dilated(
        x, w_conv, window_strides=(1, 1), padding=((1, 2), (1, 2)),
        lhs_dilation=(2, 2), rhs_dilation=(1, 1),
        dimension_numbers=('NCHW', 'OIHW', 'NCHW'))
    y = y + b[None, :, None, None]
    mean = jnp.mean(y, axis=(0, 2, 3), keepdims=True)
    var = jnp.mean((y - mean) ** 2, axis=(0, 2, 3), keepdims=True)
    yhat = (y - mean) / jnp.sqrt(var + eps)
    out = yhat * gamma[None, :, None, None] + beta[None, :, None, None]
    return jnp.maximum(out, 0.0)


if __name__ == "__main__":
    key = jax.random.PRNGKey(0)
    k1, k2, k3, k4, k5 = jax.random.split(key, 5)

    N, Cin, Cout, H, W = 2, 4, 8, 16, 16
    x = jax.random.normal(k1, (N, Cin, H, W), jnp.float32)
    # Deterministic synthetic parameters (shapes from the module __init__).
    w = 0.2 * jax.random.normal(k2, (Cin, Cout, 3, 3), jnp.float32)   # ConvTranspose2d.weight
    b = 0.1 * jax.random.normal(k3, (Cout,), jnp.float32)             # ConvTranspose2d.bias
    gamma = 1.0 + 0.1 * jax.random.normal(k4, (Cout,), jnp.float32)   # bn.weight
    beta = 0.1 * jax.random.normal(k5, (Cout,), jnp.float32)          # bn.bias

    # row_block=8 exercises the multi-tile path (halo row crossing tiles).
    out = jax.block_until_ready(upsampler_block(x, w, b, gamma, beta, row_block=8))
    ref = reference(x, w, b, gamma, beta)

    assert out.shape == (N, Cout, 2 * H, 2 * W), out.shape
    max_err = float(jnp.max(jnp.abs(out - ref)))
    assert jnp.allclose(out, ref, atol=1e-3, rtol=1e-3), f"max abs err {max_err}"
    print("KERNEL_OK")
</pallas_src>

<mosaic_0001>
module attributes {stable_mosaic.version = 11 : i64} {
  func.func @_convt_stats_kernel(%arg0: i32, %arg1: i32, %arg2: memref<1x8x17x4xf32, #tpu.memory_space<vmem>>, %arg3: memref<1x1x17x4xf32, #tpu.memory_space<vmem>>, %arg4: memref<4x4x32xf32, #tpu.memory_space<vmem>>, %arg5: memref<1x128x32xf32, #tpu.memory_space<vmem>>, %arg6: memref<1x1x2x32xf32, #tpu.memory_space<vmem>>) attributes {dimension_semantics = [#tpu.dimension_semantics<parallel>, #tpu.dimension_semantics<parallel>], iteration_bounds = array<i64: 2, 2>, scalar_prefetch = 0 : i64, scratch_operands = 0 : i64, tpu.core_type = #tpu.core_type<tc>, window_params = [{transform_indices = @transform_0, window_bounds = array<i64: 1, 8, 17, 4>}, {transform_indices = @transform_1, window_bounds = array<i64: 1, 1, 17, 4>}, {pipeline_mode = #tpu.pipeline_mode<synchronous>, transform_indices = @transform_2, window_bounds = array<i64: 4, 4, 32>}, {transform_indices = @transform_3, window_bounds = array<i64: 1, 128, 32>}, {transform_indices = @transform_4, window_bounds = array<i64: 1, 1, 2, 32>}]} {
    %c0 = arith.constant 0 : index
    %c0_0 = arith.constant 0 : index
    %c0_1 = arith.constant 0 : index
    %c0_2 = arith.constant 0 : index
    %0 = vector.load %arg2[%c0, %c0_0, %c0_1, %c0_2] : memref<1x8x17x4xf32, #tpu.memory_space<vmem>>, vector<1x8x17x4xf32>
    %1 = vector.shape_cast %0 : vector<1x8x17x4xf32> to vector<8x17x4xf32>
    %c0_3 = arith.constant 0 : index
    %c0_4 = arith.constant 0 : index
    %c0_5 = arith.constant 0 : index
    %c0_6 = arith.constant 0 : index
    %2 = vector.load %arg3[%c0_3, %c0_4, %c0_5, %c0_6] : memref<1x1x17x4xf32, #tpu.memory_space<vmem>>, vector<1x1x17x4xf32>
    %3 = vector.shape_cast %2 : vector<1x1x17x4xf32> to vector<1x17x4xf32>
    %4 = vector.extract_strided_slice %1 {offsets = [1, 0, 0], sizes = [7, 17, 4], strides = [1, 1, 1]} : vector<8x17x4xf32> to vector<7x17x4xf32>
    %5 = tpu.concatenate %4, %3 in 0 : vector<7x17x4xf32>, vector<1x17x4xf32> -> vector<8x17x4xf32>
    %6 = vector.extract_strided_slice %1 {offsets = [0, 0, 0], sizes = [8, 16, 4], strides = [1, 1, 1]} : vector<8x17x4xf32> to vector<8x16x4xf32>
    %7 = vector.shape_cast %6 : vector<8x16x4xf32> to vector<128x4xf32>
    %8 = vector.extract_strided_slice %1 {offsets = [0, 1, 0], sizes = [8, 16, 4], strides = [1, 1, 1]} : vector<8x17x4xf32> to vector<8x16x4xf32>
    %9 = vector.shape_cast %8 : vector<8x16x4xf32> to vector<128x4xf32>
    %10 = vector.extract_strided_slice %5 {offsets = [0, 0, 0], sizes = [8, 16, 4], strides = [1, 1, 1]} : vector<8x17x4xf32> to vector<8x16x4xf32>
    %11 = vector.shape_cast %10 : vector<8x16x4xf32> to vector<128x4xf32>
    %12 = vector.extract_strided_slice %5 {offsets = [0, 1, 0], sizes = [8, 16, 4], strides = [1, 1, 1]} : vector<8x17x4xf32> to vector<8x16x4xf32>
    %13 = vector.shape_cast %12 : vector<8x16x4xf32> to vector<128x4xf32>
    %c0_7 = arith.constant 0 : index
    %c0_8 = arith.constant 0 : index
    %c0_9 = arith.constant 0 : index
    %14 = vector.load %arg4[%c0_7, %c0_8, %c0_9] : memref<4x4x32xf32, #tpu.memory_space<vmem>>, vector<1x4x32xf32>
    %15 = vector.shape_cast %14 : vector<1x4x32xf32> to vector<4x32xf32>
    %cst = arith.constant dense<0.000000e+00> : vector<128x32xf32>
    %16 = tpu.matmul %7, %15, %cst {dimension_numbers = #tpu.dot_dimension_numbers<[1], [0], [0], [1], [0, 0, 1, 1], [], []>} : vector<128x4xf32>, vector<4x32xf32>, vector<128x32xf32> -> vector<128x32xf32>
    %c1 = arith.constant 1 : index
    %c0_10 = arith.constant 0 : index
    %c0_11 = arith.constant 0 : index
    %17 = vector.load %arg4[%c1, %c0_10, %c0_11] : memref<4x4x32xf32, #tpu.memory_space<vmem>>, vector<1x4x32xf32>
    %18 = vector.shape_cast %17 : vector<1x4x32xf32> to vector<4x32xf32>
    %cst_12 = arith.constant dense<0.000000e+00> : vector<128x32xf32>
    %19 = tpu.matmul %9, %18, %cst_12 {dimension_numbers = #tpu.dot_dimension_numbers<[1], [0], [0], [1], [0, 0, 1, 1], [], []>} : vector<128x4xf32>, vector<4x32xf32>, vector<128x32xf32> -> vector<128x32xf32>
    %20 = arith.addf %16, %19 : vector<128x32xf32>
    %c2 = arith.constant 2 : index
    %c0_13 = arith.constant 0 : index
    %c0_14 = arith.constant 0 : index
    %21 = vector.load %arg4[%c2, %c0_13, %c0_14] : memref<4x4x32xf32, #tpu.memory_space<vmem>>, vector<1x4x32xf32>
    %22 = vector.shape_cast %21 : vector<1x4x32xf32> to vector<4x32xf32>
    %cst_15 = arith.constant dense<0.000000e+00> : vector<128x32xf32>
    %23 = tpu.matmul %11, %22, %cst_15 {dimension_numbers = #tpu.dot_dimension_numbers<[1], [0], [0], [1], [0, 0, 1, 1], [], []>} : vector<128x4xf32>, vector<4x32xf32>, vector<128x32xf32> -> vector<128x32xf32>
    %24 = arith.addf %20, %23 : vector<128x32xf32>
    %c3 = arith.constant 3 : index
    %c0_16 = arith.constant 0 : index
    %c0_17 = arith.constant 0 : index
    %25 = vector.load %arg4[%c3, %c0_16, %c0_17] : memref<4x4x32xf32, #tpu.memory_space<vmem>>, vector<1x4x32xf32>
    %26 = vector.shape_cast %25 : vector<1x4x32xf32> to vector<4x32xf32>
    %cst_18 = arith.constant dense<0.000000e+00> : vector<128x32xf32>
    %27 = tpu.matmul %13, %26, %cst_18 {dimension_numbers = #tpu.dot_dimension_numbers<[1], [0], [0], [1], [0, 0, 1, 1], [], []>} : vector<128x4xf32>, vector<4x32xf32>, vector<128x32xf32> -> vector<128x32xf32>
    %28 = arith.addf %24, %27 : vector<128x32xf32>
    %c0_19 = arith.constant 0 : index
    %c0_20 = arith.constant 0 : index
    %c0_21 = arith.constant 0 : index
    %29 = vector.load %arg5[%c0_19, %c0_20, %c0_21] : memref<1x128x32xf32, #tpu.memory_space<vmem>>, vector<1x128x32xf32>
    %30 = vector.shape_cast %29 : vector<1x128x32xf32> to vector<128x32xf32>
    %31 = vector.shape_cast %28 : vector<128x32xf32> to vector<1x128x32xf32>
    tpu.vector_store %arg5[%c0_19, %c0_20, %c0_21], %31 {strides = array<i32>} : memref<1x128x32xf32, #tpu.memory_space<vmem>>, vector<1x128x32xf32>,
    %cst_22 = arith.constant dense<0.000000e+00> : vector<32xf32>
    %32 = vector.multi_reduction <add>, %28, %cst_22 [0] : vector<128x32xf32> to vector<32xf32>
    %33 = vector.shape_cast %32 : vector<32xf32> to vector<1x32xf32>
    %34 = arith.mulf %28, %28 : vector<128x32xf32>
    %cst_23 = arith.constant dense<0.000000e+00> : vector<32xf32>
    %35 = vector.multi_reduction <add>, %34, %cst_23 [0] : vector<128x32xf32> to vector<32xf32>
    %36 = vector.shape_cast %35 : vector<32xf32> to vector<1x32xf32>
    %37 = tpu.concatenate %33, %36 in 0 : vector<1x32xf32>, vector<1x32xf32> -> vector<2x32xf32>
    %c0_24 = arith.constant 0 : index
    %c0_25 = arith.constant 0 : index
    %c0_26 = arith.constant 0 : index
    %c0_27 = arith.constant 0 : index
    %38 = vector.load %arg6[%c0_24, %c0_25, %c0_26, %c0_27] : memref<1x1x2x32xf32, #tpu.memory_space<vmem>>, vector<1x1x2x32xf32>
    %39 = vector.shape_cast %38 : vector<1x1x2x32xf32> to vector<2x32xf32>
    %40 = vector.shape_cast %37 : vector<2x32xf32> to vector<1x1x2x32xf32>
    tpu.vector_store %arg6[%c0_24, %c0_25, %c0_26, %c0_27], %40 {strides = array<i32>} : memref<1x1x2x32xf32, #tpu.memory_space<vmem>>, vector<1x1x2x32xf32>,
    return
  }
  func.func @transform_0(%arg0: i32, %arg1: i32) -> (i32, i32, i32, i32) {
    %c0_i32 = arith.constant 0 : i32
    %c0_i32_0 = arith.constant 0 : i32
    %c0_i32_1 = arith.constant 0 : i32
    return %arg0, %arg1, %c0_i32, %c0_i32_0 : i32, i32, i32, i32
  }
  func.func @transform_1(%arg0: i32, %arg1: i32) -> (i32, i32, i32, i32) {
    %c1_i32 = arith.constant 1 : i32
    %0 = arith.addi %arg1, %c1_i32 : i32
    %c8_i32 = arith.constant 8 : i32
    %1 = arith.muli %0, %c8_i32 : i32
    %c0_i32 = arith.constant 0 : i32
    %c0_i32_0 = arith.constant 0 : i32
    %c0_i32_1 = arith.constant 0 : i32
    return %arg0, %1, %c0_i32, %c0_i32_0 : i32, i32, i32, i32
  }
  func.func @transform_2(%arg0: i32, %arg1: i32) -> (i32, i32, i32) {
    %c0_i32 = arith.constant 0 : i32
    %c0_i32_0 = arith.constant 0 : i32
    %c0_i32_1 = arith.constant 0 : i32
    %c0_i32_2 = arith.constant 0 : i32
    return %c0_i32, %c0_i32_0, %c0_i32_1 : i32, i32, i32
  }
  func.func @transform_3(%arg0: i32, %arg1: i32) -> (i32, i32, i32) {
    %c0_i32 = arith.constant 0 : i32
    %c0_i32_0 = arith.constant 0 : i32
    return %arg0, %arg1, %c0_i32 : i32, i32, i32
  }
  func.func @transform_4(%arg0: i32, %arg1: i32) -> (i32, i32, i32, i32) {
    %c0_i32 = arith.constant 0 : i32
    %c0_i32_0 = arith.constant 0 : i32
    %c0_i32_1 = arith.constant 0 : i32
    return %arg0, %arg1, %c0_i32, %c0_i32_0 : i32, i32, i32, i32
  }
}

</mosaic_0001>

<llo_original>
// kernel: tpu_custom_call.1
$region0: #{tpu_custom_call.1}
  #allocation0 [shape = 'u32[]', space=smem, size = 0x4, offset = 0x4, fixed_abs, tag = 'smem constant byte address 0x4 - core index']
  #allocation1 [shape = 'u32[144,128]{1,0:T(1,128)}', space=vmem, size = 0x12000, scoped, tag = 'internal scratch']
  %s0 = inlined_call_operand.vmem [shape: f32[2,17,17,4], index: 0, kind: input, shape index: {}]
  %s1 = inlined_call_operand.vmem [shape: f32[2,17,17,4], index: 1, kind: input, shape index: {}]
  %s2 = inlined_call_operand.vmem [shape: f32[4,4,32], index: 2, kind: input, shape index: {}]
  %s3 = inlined_call_operand.vmem [shape: f32[2,256,32], index: 3, kind: output, shape index: {0}]
  %s4 = inlined_call_operand.hbm [shape: f32[2,2,2,32], index: 4, kind: output, shape index: {1}]
  %5 = xla_tuple %s3, %s4
  %s6 = sld [smem:[#allocation0]]
  $region53: #{tpu_custom_call.1} parent=0
    _
  %s8 = ssub.s32 1, %s6
  %s9 = scalar_select 0, %s8, %s6
  $region1: #{tpu_custom_call.1} parent=0
    #allocation2 [shape = 'u8[2048]{0}', space=vmem, size = 0x800, scoped, tag = 'output window, operand 1']
    #allocation3 [shape = 's32[2]{0}', space=sflag, size = 0x8, scoped, tag = 'scoped memory for tpu_custom_call.1']
    %10 = vsyncpa [#allocation3], 0
    %s11 = scalar_lea.sflag [#allocation3], 1
    %12 = vsyncpa %s11, 0
    loop: start=0, step=1, limit=6
    $region2: #{tpu_custom_call.1} parent=1 // loop_pre_header
      _
    $region3: #{tpu_custom_call.1} parent=1 // loop_header
      %s14 = sphi 0, %s18
      %p15 = scmp.ge.s32.totalorder %s14, 6
      %s21 = sphi 0, %s33
      %s22 = sphi 0, %s29
      %s23 = sphi 0, %s21
      %s24 = sphi 0, %s22
      %s25 = sphi 0, %s23
      %s26 = sphi 0, %s24
      %s38 = sphi 0, %s40
      %s41 = sphi 0, %s38
      %s42 = sphi 0, %s41
      %s58 = sphi 0, %s42
      %s70 = sphi 0, %s72
      %s73 = sphi 0, %s70
      %s74 = sphi 0, %s73
      %s90 = sphi 0, %s74
      %s94 = sphi 0, %s94
      %s96 = sphi 0, %s94
      %s97 = sphi 0, %s96
      %s111 = sphi 0, %s97
      %s119 = sphi 0, %s121
      %s122 = sphi 0, %s119
      %s123 = sphi 0, %s122
      %s139 = sphi 0, %s123
      %s147 = sphi 0, %s149
      %s150 = sphi 0, %s147
      %s151 = sphi 0, %s150
      %s167 = sphi 0, %s151
    $region4: #{tpu_custom_call.1} parent=1 // loop_header_branch
      %17 = sbr.rel (%p15) target = $region8
    $region5: #{tpu_custom_call.1} parent=1 // loop_body
      %s19 = ssub.s32 %s14, 1
      %s20 = ssub.s32 %s14, 2
      %s27 = sadd.s32 1, %s22
      %p28 = scmp.ge.s32.totalorder %s27, 2
      %s29 = scalar_select %p28, 0, %s27
      %s30 = sadd.s32 1, %s21
      %s31 = scalar_select %p28, %s30, %s21
      %p32 = scmp.ge.s32.totalorder %s31, 2
      %s33 = scalar_select %p32, 0, %s31
      %s34 = ssub.s32 %s21, %s33
      %s35 = ssub.s32 %s22, %s29
      %s36 = sor.u32 %s34, %s35
      %p37 = scmp.eq.s32.totalorder %s36, 0
      %s39 = sadd.s32 %s38, 1
      %s40 = scalar_select %p37, %s38, %s39
      %p43 = pneg %p37
      %p44 = scmp.eq.s32.totalorder %s14, 3
      %p45 = por %p43, %p44
      %p46 = scmp.ne.s32.totalorder %s38, %s41
      %p47 = scmp.eq.s32.totalorder %s14, 0
      %p48 = por %p46, %p47
      %p49 = scmp.ne.s32.totalorder %s38, %s41
      %p50 = scmp.eq.s32.totalorder %s19, 3
      %p51 = por %p49, %p50
      %p52 = scmp.ne.s32.totalorder %s41, %s42
      %p53 = scmp.eq.s32.totalorder %s19, 0
      %p54 = por %p52, %p53
      %p55 = scmp.ne.s32.totalorder %s41, %s42
      %p56 = scmp.eq.s32.totalorder %s20, 3
      %p57 = por %p55, %p56
      %p59 = scmp.ne.s32.totalorder %s42, %s58
      %p60 = scmp.eq.s32.totalorder %s20, 0
      %p61 = por %p59, %p60
      %s62 = sadd.s32 %s22, 1
      %s63 = smul.u32 %s62, 8
      %s64 = sadd.s32 %s29, 1
      %s65 = smul.u32 %s64, 8
      %s66 = ssub.s32 %s21, %s33
      %s67 = ssub.s32 %s63, %s65
      %s68 = sor.u32 %s66, %s67
      %p69 = scmp.eq.s32.totalorder %s68, 0
      %s71 = sadd.s32 %s70, 1
      %s72 = scalar_select %p69, %s70, %s71
      %p75 = pneg %p69
      %p76 = scmp.eq.s32.totalorder %s14, 3
      %p77 = por %p75, %p76
      %p78 = scmp.ne.s32.totalorder %s70, %s73
      %p79 = scmp.eq.s32.totalorder %s14, 0
      %p80 = por %p78, %p79
      %p81 = scmp.ne.s32.totalorder %s70, %s73
      %p82 = scmp.eq.s32.totalorder %s19, 3
      %p83 = por %p81, %p82
      %p84 = scmp.ne.s32.totalorder %s73, %s74
      %p85 = scmp.eq.s32.totalorder %s19, 0
      %p86 = por %p84, %p85
      %p87 = scmp.ne.s32.totalorder %s73, %s74
      %p88 = scmp.eq.s32.totalorder %s20, 3
      %p89 = por %p87, %p88
      %p91 = scmp.ne.s32.totalorder %s74, %s90
      %p92 = scmp.eq.s32.totalorder %s20, 0
      %p93 = por %p91, %p92
      %s95 = sadd.s32 %s94, 1
      %p98 = scmp.eq.s32.totalorder %s14, 3
      %p99 = scmp.ne.s32.totalorder %s94, %s96
      %p100 = scmp.eq.s32.totalorder %s14, 0
      %p101 = por %p99, %p100
      %p102 = scmp.ne.s32.totalorder %s94, %s96
      %p103 = scmp.eq.s32.totalorder %s19, 3
      %p104 = por %p102, %p103
      %p105 = scmp.ne.s32.totalorder %s96, %s97
      %p106 = scmp.eq.s32.totalorder %s19, 0
      %p107 = por %p105, %p106
      %p108 = scmp.ne.s32.totalorder %s96, %s97
      %p109 = scmp.eq.s32.totalorder %s20, 3
      %p110 = por %p108, %p109
      %p112 = scmp.ne.s32.totalorder %s97, %s111
      %p113 = scmp.eq.s32.totalorder %s20, 0
      %p114 = por %p112, %p113
      %s115 = ssub.s32 %s21, %s33
      %s116 = ssub.s32 %s22, %s29
      %s117 = sor.u32 %s115, %s116
      %p118 = scmp.eq.s32.totalorder %s117, 0
      %s120 = sadd.s32 %s119, 1
      %s121 = scalar_select %p118, %s119, %s120
      %p124 = pneg %p118
      %p125 = scmp.eq.s32.totalorder %s14, 3
      %p126 = por %p124, %p125
      %p127 = scmp.ne.s32.totalorder %s119, %s122
      %p128 = scmp.eq.s32.totalorder %s14, 0
      %p129 = por %p127, %p128
      %p130 = scmp.ne.s32.totalorder %s119, %s122
      %p131 = scmp.eq.s32.totalorder %s19, 3
      %p132 = por %p130, %p131
      %p133 = scmp.ne.s32.totalorder %s122, %s123
      %p134 = scmp.eq.s32.totalorder %s19, 0
      %p135 = por %p133, %p134
      %p136 = scmp.ne.s32.totalorder %s122, %s123
      %p137 = scmp.eq.s32.totalorder %s20, 3
      %p138 = por %p136, %p137
      %p140 = scmp.ne.s32.totalorder %s123, %s139
      %p141 = scmp.eq.s32.totalorder %s20, 0
      %p142 = por %p140, %p141
      %s143 = ssub.s32 %s21, %s33
      %s144 = ssub.s32 %s22, %s29
      %s145 = sor.u32 %s143, %s144
      %p146 = scmp.eq.s32.totalorder %s145, 0
      %s148 = sadd.s32 %s147, 1
      %s149 = scalar_select %p146, %s147, %s148
      %p152 = pneg %p146
      %p153 = scmp.eq.s32.totalorder %s14, 3
      %p154 = por %p152, %p153
      %p155 = scmp.ne.s32.totalorder %s147, %s150
      %p156 = scmp.eq.s32.totalorder %s14, 0
      %p157 = por %p155, %p156
      %p158 = scmp.ne.s32.totalorder %s147, %s150
      %p159 = scmp.eq.s32.totalorder %s19, 3
      %p160 = por %p158, %p159
      %p161 = scmp.ne.s32.totalorder %s150, %s151
      %p162 = scmp.eq.s32.totalorder %s19, 0
      %p163 = por %p161, %p162
      %p164 = scmp.ne.s32.totalorder %s150, %s151
      %p165 = scmp.eq.s32.totalorder %s20, 3
      %p166 = por %p164, %p165
      %p168 = scmp.ne.s32.totalorder %s151, %s167
      %p169 = scmp.eq.s32.totalorder %s20, 0
      %p170 = por %p168, %p169
      %p171 = scmp.le.s32.totalorder 1, %s14
      %p172 = scmp.lt.s32.totalorder %s14, 5
      %p173 = pnand %p171, %p172
      %p174 = pneg %p173
      // Predicated region
      $region9: #{tpu_custom_call.1} parent=5 // pred_check
        _
      $region10: #{tpu_custom_call.1} parent=5 // pred_check_branch
        %176 = sbr.rel (%p173) target = $region12
      $region11: #{tpu_custom_call.1} parent=5 // pred_region
        %s177 = ssub.s32 %s14, 1
        // Predicated region
        $region13: #{tpu_custom_call.1} parent=11 // pred_check
          %p178 = pneg %p107
        $region14: #{tpu_custom_call.1} parent=11 // pred_check_branch
          %180 = sbr.rel (%p178) target = $region16
        $region15: #{tpu_custom_call.1} parent=11 // pred_region
          _
        $region16: #{tpu_custom_call.1} parent=11 // pred_fallthru
          _
      $region12: #{tpu_custom_call.1} parent=5 // pred_fallthru
        _
      %p181 = scmp.lt.s32.totalorder %s14, 4
      // Predicated region
      $region17: #{tpu_custom_call.1} parent=5 // pred_check
        %p182 = pneg %p181
      $region18: #{tpu_custom_call.1} parent=5 // pred_check_branch
        %184 = sbr.rel (%p182) target = $region20
      $region19: #{tpu_custom_call.1} parent=5 // pred_region
        // Predicated region
        $region21: #{tpu_custom_call.1} parent=19 // pred_check
          %p185 = pneg %p48
        $region22: #{tpu_custom_call.1} parent=19 // pred_check_branch
          %187 = sbr.rel (%p185) target = $region24
        $region23: #{tpu_custom_call.1} parent=19 // pred_region
          %s188 = smul.u32 8, %s22
          %s189 = ssub.s32 17, %s188
          %p190 = scmp.lt.s32.totalorder %s189, 8
          %s191 = scalar_select %p190, %s189, 8
          %s192 = smul.u32 128, %s191
          %s193 = smul.u32 %s192, 3
          %p194 = scmp.lt.s32.totalorder %s21, 1
          %s195 = scalar_select %p194, %s21, 1
          %p196 = scmp.lt.s32.totalorder %s188, 16
          %s197 = scalar_select %p196, %s188, 16
          %s198 = smul.addr %s197, 3
          %s199 = smul.addr %s195, 51
          %s200 = sadd.s32 %s198, %s199
          %s201 = smul.addr %s200, 8
          %s202 = scalar_lea.vmem %s0, %s201
          %s203 = smul.u32 8, %s22
          %s204 = ssub.s32 17, %s203
          %p205 = scmp.lt.s32.totalorder %s204, 8
          %s206 = scalar_select %p205, %s204, 8
          %s207 = smul.u32 128, %s206
          %s208 = smul.u32 %s207, 3
        $region24: #{tpu_custom_call.1} parent=19 // pred_fallthru
          _
        // Predicated region
        $region25: #{tpu_custom_call.1} parent=19 // pred_check
          %p209 = pneg %p80
        $region26: #{tpu_custom_call.1} parent=19 // pred_check_branch
          %211 = sbr.rel (%p209) target = $region28
        $region27: #{tpu_custom_call.1} parent=19 // pred_region
          %s212 = sadd.s32 %s22, 1
          %s213 = smul.u32 %s212, 8
          %p214 = scmp.lt.s32.totalorder %s21, 1
          %s215 = scalar_select %p214, %s21, 1
          %p216 = scmp.lt.s32.totalorder %s213, 16
          %s217 = scalar_select %p216, %s213, 16
          %s218 = smul.addr %s217, 3
          %s219 = smul.addr %s215, 51
          %s220 = sadd.s32 %s218, %s219
          %s221 = smul.addr %s220, 8
          %s222 = scalar_lea.vmem %s1, %s221
          %s223 = sadd.s32 %s22, 1
          %s224 = smul.u32 %s223, 8
        $region28: #{tpu_custom_call.1} parent=19 // pred_fallthru
          _
      $region20: #{tpu_custom_call.1} parent=5 // pred_fallthru
        _
      %p225 = scmp.le.s32.totalorder 1, %s14
      %p226 = scmp.lt.s32.totalorder %s14, 5
      %p227 = pnand %p225, %p226
      %p228 = pneg %p227
      // Predicated region
      $region29: #{tpu_custom_call.1} parent=5 // pred_check
        _
      $region30: #{tpu_custom_call.1} parent=5 // pred_check_branch
        %230 = sbr.rel (%p227) target = $region32
      $region31: #{tpu_custom_call.1} parent=5 // pred_region
        %s231 = ssub.s32 %s14, 1
        %s232 = smul.u32 8, %s24
        %s233 = ssub.s32 17, %s232
        %p234 = scmp.lt.s32.totalorder %s233, 8
        %s235 = scalar_select %p234, %s233, 8
        %s236 = smul.u32 128, %s235
        %s237 = smul.u32 %s236, 3
        %p238 = scmp.lt.s32.totalorder %s23, 1
        %s239 = scalar_select %p238, %s23, 1
        %p240 = scmp.lt.s32.totalorder %s232, 16
        %s241 = scalar_select %p240, %s232, 16
        %s242 = smul.addr %s241, 3
        %s243 = smul.addr %s239, 51
        %s244 = sadd.s32 %s242, %s243
        %s245 = smul.addr %s244, 8
        %s246 = scalar_lea.vmem %s0, %s245
        %p247 = pneg %p54
        %p248 = pneg %p51
        %s249 = sadd.s32 %s24, 1
        %s250 = smul.u32 %s249, 8
        %p251 = scmp.lt.s32.totalorder %s23, 1
        %s252 = scalar_select %p251, %s23, 1
        %p253 = scmp.lt.s32.totalorder %s250, 16
        %s254 = scalar_select %p253, %s250, 16
        %s255 = smul.addr %s254, 3
        %s256 = smul.addr %s252, 51
        %s257 = sadd.s32 %s255, %s256
        %s258 = smul.addr %s257, 8
        %s259 = scalar_lea.vmem %s1, %s258
        %p260 = pneg %p86
        %p261 = pneg %p83
        %p262 = pneg %p107
        %p263 = pneg %p104
        %p264 = pneg %p135
        %p265 = pneg %p132
        %s266 = smul.u32 16, %s24
        %p267 = scmp.lt.s32.totalorder %s23, 1
        %s268 = scalar_select %p267, %s23, 1
        %p269 = scmp.lt.s32.totalorder %s266, 31
        %s270 = scalar_select %p269, %s266, 31
        %s271 = smul.addr %s268, 32
        %s272 = sadd.s32 %s270, %s271
        %s273 = smul.addr %s272, 8
        %s274 = scalar_lea.vmem %s3, %s273
        %p275 = pneg %p163
        %p276 = pneg %p160
        %s277 = sand.u32 %s150, 1
        %s278 = scalar_lea.sflag [#allocation3], %s277
        %s279 = sand.u32 %s150, 1
        %s280 = smul.addr %s279, 2
        %s281 = scalar_lea.vmem [#allocation2], %s280
        %s282 = smul.u32 8, %s24
        %s283 = ssub.s32 17, %s282
        %p284 = scmp.lt.s32.totalorder %s283, 8
        %s285 = scalar_select %p284, %s283, 8
        %s286 = smul.u32 128, %s285
        %s287 = smul.u32 %s286, 3
        %p288 = scmp.lt.s32.totalorder %s23, 1
        %s289 = scalar_select %p288, %s23, 1
        %p290 = scmp.lt.s32.totalorder %s282, 16
        %s291 = scalar_select %p290, %s282, 16
        %s292 = smul.addr %s291, 3
        %s293 = smul.addr %s289, 51
        %s294 = sadd.s32 %s292, %s293
        %s295 = smul.addr %s294, 8
        %s296 = scalar_lea.vmem %s0, %s295
        %s297 = smul.u32 8, %s24
        %s298 = ssub.s32 17, %s297
        %p299 = scmp.lt.s32.totalorder %s298, 8
        %s300 = scalar_select %p299, %s298, 8
        %s301 = smul.u32 128, %s300
        %s302 = smul.u32 %s301, 3
        %s303 = sadd.s32 %s24, 1
        %s304 = smul.u32 %s303, 8
        %p305 = scmp.lt.s32.totalorder %s23, 1
        %s306 = scalar_select %p305, %s23, 1
        %p307 = scmp.lt.s32.totalorder %s304, 16
        %s308 = scalar_select %p307, %s304, 16
        %s309 = smul.addr %s308, 3
        %s310 = smul.addr %s306, 51
        %s311 = sadd.s32 %s309, %s310
        %s312 = smul.addr %s311, 8
        %s313 = scalar_lea.vmem %s1, %s312
        %s314 = sadd.s32 %s24, 1
        %s315 = smul.u32 %s314, 8
        %s316 = smul.u32 16, %s24
        %p317 = scmp.lt.s32.totalorder %s23, 1
        %s318 = scalar_select %p317, %s23, 1
        %p319 = scmp.lt.s32.totalorder %s316, 31
        %s320 = scalar_select %p319, %s316, 31
        %s321 = smul.addr %s318, 32
        %s322 = sadd.s32 %s320, %s321
        %s323 = smul.addr %s322, 8
        %s324 = scalar_lea.vmem %s3, %s323
        %s325 = smul.u32 16, %s24
        %v326 = vld [vmem:[%s296] sm:$0xff]
        %v327 = vld [vmem:[%s296 + $0x8] sm:$0xff]
        %v328 = vld [vmem:[%s296 + $0x10] sm:$0x1]
        %v329 = vld [vmem:[%s296 + $0x18] sm:$0xff]
        %v330 = vld [vmem:[%s296 + $0x20] sm:$0xff]
        %v331 = vld [vmem:[%s296 + $0x28] sm:$0x1]
        %v332 = vld [vmem:[%s296 + $0x30] sm:$0xff]
        %v333 = vld [vmem:[%s296 + $0x38] sm:$0xff]
        %v334 = vld [vmem:[%s296 + $0x40] sm:$0x1]
        %v335 = vld [vmem:[%s296 + $0x48] sm:$0xff]
        %v336 = vld [vmem:[%s296 + $0x50] sm:$0xff]
        %v337 = vld [vmem:[%s296 + $0x58] sm:$0x1]
        %v338 = vld [vmem:[%s296 + $0x60] sm:$0xff]
        %v339 = vld [vmem:[%s296 + $0x68] sm:$0xff]
        %v340 = vld [vmem:[%s296 + $0x70] sm:$0x1]
        %v341 = vld [vmem:[%s296 + $0x78] sm:$0xff]
        %v342 = vld [vmem:[%s296 + $0x80] sm:$0xff]
        %v343 = vld [vmem:[%s296 + $0x88] sm:$0x1]
        %v344 = vld [vmem:[%s296 + $0x90] sm:$0xff]
        %v345 = vld [vmem:[%s296 + $0x98] sm:$0xff]
        %v346 = vld [vmem:[%s296 + $0xa0] sm:$0x1]
        %v347 = vld [vmem:[%s296 + $0xa8] sm:$0xff]
        %v348 = vld [vmem:[%s296 + $0xb0] sm:$0xff]
        %v349 = vld [vmem:[%s296 + $0xb8] sm:$0x1]
        %v350 = vld [vmem:[%s313] sm:$0xff]
        %v351 = vld [vmem:[%s313 + $0x8] sm:$0xff]
        %v352 = vld [vmem:[%s313 + $0x10] sm:$0x1]
        %vm377 = vcmask 1046528
        %v378 = vrot.slane %v326, 1
        %v379 = vrot.slane %v327, 1
        %v380 = vsel %vm377, %v378, %v379
        %v381 = vrot.slane %v328, 1
        %v382 = vsel %vm377, %v379, %v381
        %v383 = vrot.slane %v329, 1
        %v384 = vrot.slane %v330, 1
        %v385 = vsel %vm377, %v383, %v384
        %v386 = vrot.slane %v331, 1
        %v387 = vsel %vm377, %v384, %v386
        %v388 = vrot.slane %v332, 1
        %v389 = vrot.slane %v333, 1
        %v390 = vsel %vm377, %v388, %v389
        %v391 = vrot.slane %v334, 1
        %v392 = vsel %vm377, %v389, %v391
        %v393 = vrot.slane %v335, 1
        %v394 = vrot.slane %v336, 1
        %v395 = vsel %vm377, %v393, %v394
        %v396 = vrot.slane %v337, 1
        %v397 = vsel %vm377, %v394, %v396
        %v398 = vrot.slane %v338, 1
        %v399 = vrot.slane %v339, 1
        %v400 = vsel %vm377, %v398, %v399
        %v401 = vrot.slane %v340, 1
        %v402 = vsel %vm377, %v399, %v401
        %v403 = vrot.slane %v341, 1
        %v404 = vrot.slane %v342, 1
        %v405 = vsel %vm377, %v403, %v404
        %v406 = vrot.slane %v343, 1
        %v407 = vsel %vm377, %v404, %v406
        %v408 = vrot.slane %v344, 1
        %v409 = vrot.slane %v345, 1
        %v410 = vsel %vm377, %v408, %v409
        %v411 = vrot.slane %v346, 1
        %v412 = vsel %vm377, %v409, %v411
        %v413 = vrot.slane %v347, 1
        %v414 = vrot.slane %v348, 1
        %v415 = vsel %vm377, %v413, %v414
        %v416 = vrot.slane %v349, 1
        %v417 = vsel %vm377, %v414, %v416
        %v421 = vrot.slane %v350, 1
        %v422 = vrot.slane %v351, 1
        %v423 = vsel %vm377, %v421, %v422
        %v424 = vrot.slane %v352, 1
        %v425 = vsel %vm377, %v422, %v424
        %v426 = vld [vmem:[%s2] sm:$0xf]
        %s427 = scalar_lea.vmem %s2, 4
        %v428 = vld [vmem:[%s427] sm:$0xf]
        %vm429 = vcmask 31744
        %v430 = vsel %vm429, %v380, 0
        %v432 = vsel %vm429, %v382, 0
        %v434 = vsel %vm429, %v385, 0
        %v436 = vsel %vm429, %v387, 0
        %v438 = vsel %vm429, %v390, 0
        %v440 = vsel %vm429, %v392, 0
        %v442 = vsel %vm429, %v395, 0
        %v444 = vsel %vm429, %v397, 0
        %v446 = vsel %vm429, %v400, 0
        %v448 = vsel %vm429, %v402, 0
        %v450 = vsel %vm429, %v405, 0
        %v452 = vsel %vm429, %v407, 0
        %v454 = vsel %vm429, %v410, 0
        %v456 = vsel %vm429, %v412, 0
        %v458 = vsel %vm429, %v415, 0
        %v460 = vsel %vm429, %v417, 0
        %vm462 = vcmask 1043456
        %v464 = vsel %vm462, %v428, 0
        %466 = vmatprep.subr.mxu0 0.0
        %467 = vmatpush1.msra.mxu0 0.0
        %468 = vmatprep.subr.mxu0 0.0
        %469 = vmatpush1.msra.mxu0 0.0
        %470 = vmatprep.subr.mxu0 0.0
        %471 = vmatpush1.msra.mxu0 0.0
        %472 = vmatprep.subr.mxu0 0.0
        %473 = vmatpush1.msra.mxu0 0.0
        %474 = vmatprep.subr.mxu0 0.0
        %475 = vmatpush1.msra.mxu0 0.0
        %476 = vmatprep.subr.mxu0 0.0
        %477 = vmatpush1.msra.mxu0 0.0
        %478 = vmatprep.subr.mxu0 0.0
        %479 = vmatpush1.msra.mxu0 0.0
        %480 = vmatprep.subr.mxu0 0.0
        %481 = vmatpush1.msra.mxu0 0.0
        %482 = vmatprep.subr.mxu0 0.0
        %483 = vmatpush1.msra.mxu0 0.0
        %484 = vmatprep.subr.mxu0 0.0
        %485 = vmatpush1.msra.mxu0 0.0
        %486 = vmatprep.subr.mxu0 0.0
        %487 = vmatpush1.msra.mxu0 0.0
        %488 = vmatprep.subr.mxu0 0.0
        %489 = vmatpush1.msra.mxu0 0.0
        %490 = vmatprep.subr.mxu0 0.0
        %491 = vmatpush1.msra.mxu0 0.0
        %492 = vmatprep.subr.mxu0 0.0
        %493 = vmatpush1.msra.mxu0 0.0
        %494 = vmatprep.subr.mxu0 0.0
        %495 = vmatpush1.msra.mxu0 0.0
        %496 = vmatprep.subr.mxu0 0.0
        %497 = vmatpush1.msra.mxu0 %v464
        %498 = vmatprep.subr.mxu0 0.0
        %499 = vmatpush2.msra.mxu0 0.0
        %500 = vmatprep.subr.mxu0 0.0
        %501 = vmatpush2.msra.mxu0 0.0
        %502 = vmatprep.subr.mxu0 0.0
        %503 = vmatpush2.msra.mxu0 0.0
        %504 = vmatprep.subr.mxu0 0.0
        %505 = vmatpush2.msra.mxu0 0.0
        %506 = vmatprep.subr.mxu0 0.0
        %507 = vmatpush2.msra.mxu0 0.0
        %508 = vmatprep.subr.mxu0 0.0
        %509 = vmatpush2.msra.mxu0 0.0
        %510 = vmatprep.subr.mxu0 0.0
        %511 = vmatpush2.msra.mxu0 0.0
        %512 = vmatprep.subr.mxu0 0.0
        %513 = vmatpush2.msra.mxu0 0.0
        %514 = vmatprep.subr.mxu0 0.0
        %515 = vmatpush2.msra.mxu0 0.0
        %516 = vmatprep.subr.mxu0 0.0
        %517 = vmatpush2.msra.mxu0 0.0
        %518 = vmatprep.subr.mxu0 0.0
        %519 = vmatpush2.msra.mxu0 0.0
        %520 = vmatprep.subr.mxu0 0.0
        %521 = vmatpush2.msra.mxu0 0.0
        %522 = vmatprep.subr.mxu0 0.0
        %523 = vmatpush2.msra.mxu0 0.0
        %524 = vmatprep.subr.mxu0 0.0
        %525 = vmatpush2.msra.mxu0 0.0
        %526 = vmatprep.subr.mxu0 0.0
        %527 = vmatpush2.msra.mxu0 0.0
        %528 = vmatprep.subr.mxu0 0.0
        %529 = vmatpush2.msra.mxu0 0.0
        %530 = vmatprep.mubr.f32.mxu0 0.0
        %531 = vmatmul.mubr.f32.gmra.mxu0 %v430
        %v532 = vpop.f32.mrf.mxu0
        %v533 = vadd.f32 0.0, %v532
        %v534 = vpop.f32.mrf.mxu0
        %535 = vmatprep.mubr.f32.mxu0 0.0
        %536 = vmatmul.mubr.f32.gmra.mxu0 %v432
        %v537 = vpop.f32.mrf.mxu0
        %v538 = vadd.f32 0.0, %v537
        %v539 = vpop.f32.mrf.mxu0
        %540 = vmatprep.mubr.f32.mxu0 0.0
        %541 = vmatmul.mubr.f32.gmra.mxu0 %v434
        %v542 = vpop.f32.mrf.mxu0
        %v543 = vadd.f32 0.0, %v542
        %v544 = vpop.f32.mrf.mxu0
        %545 = vmatprep.mubr.f32.mxu0 0.0
        %546 = vmatmul.mubr.f32.gmra.mxu0 %v436
        %v547 = vpop.f32.mrf.mxu0
        %v548 = vadd.f32 0.0, %v547
        %v549 = vpop.f32.mrf.mxu0
        %550 = vmatprep.mubr.f32.mxu0 0.0
        %551 = vmatmul.mubr.f32.gmra.mxu0 %v438
        %v552 = vpop.f32.mrf.mxu0
        %v553 = vadd.f32 0.0, %v552
        %v554 = vpop.f32.mrf.mxu0
        %555 = vmatprep.mubr.f32.mxu0 0.0
        %556 = vmatmul.mubr.f32.gmra.mxu0 %v440
        %v557 = vpop.f32.mrf.mxu0
        %v558 = vadd.f32 0.0, %v557
        %v559 = vpop.f32.mrf.mxu0
        %560 = vmatprep.mubr.f32.mxu0 0.0
        %561 = vmatmul.mubr.f32.gmra.mxu0 %v442
        %v562 = vpop.f32.mrf.mxu0
        %v563 = vadd.f32 0.0, %v562
        %v564 = vpop.f32.mrf.mxu0
        %565 = vmatprep.mubr.f32.mxu0 0.0
        %566 = vmatmul.mubr.f32.gmra.mxu0 %v444
        %v567 = vpop.f32.mrf.mxu0
        %v568 = vadd.f32 0.0, %v567
        %v569 = vpop.f32.mrf.mxu0
        %570 = vmatprep.mubr.f32.mxu0 0.0
        %571 = vmatmul.mubr.f32.gmra.mxu0 %v446
        %v572 = vpop.f32.mrf.mxu0
        %v573 = vadd.f32 0.0, %v572
        %v574 = vpop.f32.mrf.mxu0
        %575 = vmatprep.mubr.f32.mxu0 0.0
        %576 = vmatmul.mubr.f32.gmra.mxu0 %v448
        %v577 = vpop.f32.mrf.mxu0
        %v578 = vadd.f32 0.0, %v577
        %v579 = vpop.f32.mrf.mxu0
        %580 = vmatprep.mubr.f32.mxu0 0.0
        %581 = vmatmul.mubr.f32.gmra.mxu0 %v450
        %v582 = vpop.f32.mrf.mxu0
        %v583 = vadd.f32 0.0, %v582
        %v584 = vpop.f32.mrf.mxu0
        %585 = vmatprep.mubr.f32.mxu0 0.0
        %586 = vmatmul.mubr.f32.gmra.mxu0 %v452
        %v587 = vpop.f32.mrf.mxu0
        %v588 = vadd.f32 0.0, %v587
        %v589 = vpop.f32.mrf.mxu0
        %590 = vmatprep.mubr.f32.mxu0 0.0
        %591 = vmatmul.mubr.f32.gmra.mxu0 %v454
        %v592 = vpop.f32.mrf.mxu0
        %v593 = vadd.f32 0.0, %v592
        %v594 = vpop.f32.mrf.mxu0
        %595 = vmatprep.mubr.f32.mxu0 0.0
        %596 = vmatmul.mubr.f32.gmra.mxu0 %v456
        %v597 = vpop.f32.mrf.mxu0
        %v598 = vadd.f32 0.0, %v597
        %v599 = vpop.f32.mrf.mxu0
        %600 = vmatprep.mubr.f32.mxu0 0.0
        %601 = vmatmul.mubr.f32.gmra.mxu0 %v458
        %v602 = vpop.f32.mrf.mxu0
        %v603 = vadd.f32 0.0, %v602
        %v604 = vpop.f32.mrf.mxu0
        %605 = vmatprep.mubr.f32.mxu0 0.0
        %606 = vmatmul.mubr.f32.gmra.mxu0 %v460
        %v607 = vpop.f32.mrf.mxu0
        %v608 = vadd.f32 0.0, %v607
        %v609 = vpop.f32.mrf.mxu0
        %610 = vdwg.mxu0
        %v611 = vsel %vm429, %v326, 0
        %v613 = vsel %vm429, %v327, 0
        %v615 = vsel %vm429, %v329, 0
        %v617 = vsel %vm429, %v330, 0
        %v619 = vsel %vm429, %v332, 0
        %v621 = vsel %vm429, %v333, 0
        %v623 = vsel %vm429, %v335, 0
        %v625 = vsel %vm429, %v336, 0
        %v627 = vsel %vm429, %v338, 0
        %v629 = vsel %vm429, %v339, 0
        %v631 = vsel %vm429, %v341, 0
        %v633 = vsel %vm429, %v342, 0
        %v635 = vsel %vm429, %v344, 0
        %v637 = vsel %vm429, %v345, 0
        %v639 = vsel %vm429, %v347, 0
        %v641 = vsel %vm429, %v348, 0
        %v644 = vsel %vm462, %v426, 0
        %646 = vmatprep.subr.mxu0 0.0
        %647 = vmatpush1.msra.mxu0 0.0
        %648 = vmatprep.subr.mxu0 0.0
        %649 = vmatpush1.msra.mxu0 0.0
        %650 = vmatprep.subr.mxu0 0.0
        %651 = vmatpush1.msra.mxu0 0.0
        %652 = vmatprep.subr.mxu0 0.0
        %653 = vmatpush1.msra.mxu0 0.0
        %654 = vmatprep.subr.mxu0 0.0
        %655 = vmatpush1.msra.mxu0 0.0
        %656 = vmatprep.subr.mxu0 0.0
        %657 = vmatpush1.msra.mxu0 0.0
        %658 = vmatprep.subr.mxu0 0.0
        %659 = vmatpush1.msra.mxu0 0.0
        %660 = vmatprep.subr.mxu0 0.0
        %661 = vmatpush1.msra.mxu0 0.0
        %662 = vmatprep.subr.mxu0 0.0
        %663 = vmatpush1.msra.mxu0 0.0
        %664 = vmatprep.subr.mxu0 0.0
        %665 = vmatpush1.msra.mxu0 0.0
        %666 = vmatprep.subr.mxu0 0.0
        %667 = vmatpush1.msra.mxu0 0.0
        %668 = vmatprep.subr.mxu0 0.0
        %669 = vmatpush1.msra.mxu0 0.0
        %670 = vmatprep.subr.mxu0 0.0
        %671 = vmatpush1.msra.mxu0 0.0
        %672 = vmatprep.subr.mxu0 0.0
        %673 = vmatpush1.msra.mxu0 0.0
        %674 = vmatprep.subr.mxu0 0.0
        %675 = vmatpush1.msra.mxu0 0.0
        %676 = vmatprep.subr.mxu0 0.0
        %677 = vmatpush1.msra.mxu0 %v644
        %678 = vmatprep.subr.mxu0 0.0
        %679 = vmatpush2.msra.mxu0 0.0
        %680 = vmatprep.subr.mxu0 0.0
        %681 = vmatpush2.msra.mxu0 0.0
        %682 = vmatprep.subr.mxu0 0.0
        %683 = vmatpush2.msra.mxu0 0.0
        %684 = vmatprep.subr.mxu0 0.0
        %685 = vmatpush2.msra.mxu0 0.0
        %686 = vmatprep.subr.mxu0 0.0
        %687 = vmatpush2.msra.mxu0 0.0
        %688 = vmatprep.subr.mxu0 0.0
        %689 = vmatpush2.msra.mxu0 0.0
        %690 = vmatprep.subr.mxu0 0.0
        %691 = vmatpush2.msra.mxu0 0.0
        %692 = vmatprep.subr.mxu0 0.0
        %693 = vmatpush2.msra.mxu0 0.0
        %694 = vmatprep.subr.mxu0 0.0
        %695 = vmatpush2.msra.mxu0 0.0
        %696 = vmatprep.subr.mxu0 0.0
        %697 = vmatpush2.msra.mxu0 0.0
        %698 = vmatprep.subr.mxu0 0.0
        %699 = vmatpush2.msra.mxu0 0.0
        %700 = vmatprep.subr.mxu0 0.0
        %701 = vmatpush2.msra.mxu0 0.0
        %702 = vmatprep.subr.mxu0 0.0
        %703 = vmatpush2.msra.mxu0 0.0
        %704 = vmatprep.subr.mxu0 0.0
        %705 = vmatpush2.msra.mxu0 0.0
        %706 = vmatprep.subr.mxu0 0.0
        %707 = vmatpush2.msra.mxu0 0.0
        %708 = vmatprep.subr.mxu0 0.0
        %709 = vmatpush2.msra.mxu0 0.0
        %710 = vmatprep.mubr.f32.mxu0 0.0
        %711 = vmatmul.mubr.f32.gmra.mxu0 %v611
        %v712 = vpop.f32.mrf.mxu0
        %v713 = vadd.f32 %v533, %v712
        %v714 = vpop.f32.mrf.mxu0
        %715 = vmatprep.mubr.f32.mxu0 0.0
        %716 = vmatmul.mubr.f32.gmra.mxu0 %v613
        %v717 = vpop.f32.mrf.mxu0
        %v718 = vadd.f32 %v538, %v717
        %v719 = vpop.f32.mrf.mxu0
        %720 = vmatprep.mubr.f32.mxu0 0.0
        %721 = vmatmul.mubr.f32.gmra.mxu0 %v615
        %v722 = vpop.f32.mrf.mxu0
        %v723 = vadd.f32 %v543, %v722
        %v724 = vpop.f32.mrf.mxu0
        %725 = vmatprep.mubr.f32.mxu0 0.0
        %726 = vmatmul.mubr.f32.gmra.mxu0 %v617
        %v727 = vpop.f32.mrf.mxu0
        %v728 = vadd.f32 %v548, %v727
        %v729 = vpop.f32.mrf.mxu0
        %730 = vmatprep.mubr.f32.mxu0 0.0
        %731 = vmatmul.mubr.f32.gmra.mxu0 %v619
        %v732 = vpop.f32.mrf.mxu0
        %v733 = vadd.f32 %v553, %v732
        %v734 = vpop.f32.mrf.mxu0
        %735 = vmatprep.mubr.f32.mxu0 0.0
        %736 = vmatmul.mubr.f32.gmra.mxu0 %v621
        %v737 = vpop.f32.mrf.mxu0
        %v738 = vadd.f32 %v558, %v737
        %v739 = vpop.f32.mrf.mxu0
        %740 = vmatprep.mubr.f32.mxu0 0.0
        %741 = vmatmul.mubr.f32.gmra.mxu0 %v623
        %v742 = vpop.f32.mrf.mxu0
        %v743 = vadd.f32 %v563, %v742
        %v744 = vpop.f32.mrf.mxu0
        %745 = vmatprep.mubr.f32.mxu0 0.0
        %746 = vmatmul.mubr.f32.gmra.mxu0 %v625
        %v747 = vpop.f32.mrf.mxu0
        %v748 = vadd.f32 %v568, %v747
        %v749 = vpop.f32.mrf.mxu0
        %750 = vmatprep.mubr.f32.mxu0 0.0
        %751 = vmatmul.mubr.f32.gmra.mxu0 %v627
        %v752 = vpop.f32.mrf.mxu0
        %v753 = vadd.f32 %v573, %v752
        %v754 = vpop.f32.mrf.mxu0
        %755 = vmatprep.mubr.f32.mxu0 0.0
        %756 = vmatmul.mubr.f32.gmra.mxu0 %v629
        %v757 = vpop.f32.mrf.mxu0
        %v758 = vadd.f32 %v578, %v757
        %v759 = vpop.f32.mrf.mxu0
        %760 = vmatprep.mubr.f32.mxu0 0.0
        %761 = vmatmul.mubr.f32.gmra.mxu0 %v631
        %v762 = vpop.f32.mrf.mxu0
        %v763 = vadd.f32 %v583, %v762
        %v764 = vpop.f32.mrf.mxu0
        %765 = vmatprep.mubr.f32.mxu0 0.0
        %766 = vmatmul.mubr.f32.gmra.mxu0 %v633
        %v767 = vpop.f32.mrf.mxu0
        %v768 = vadd.f32 %v588, %v767
        %v769 = vpop.f32.mrf.mxu0
        %770 = vmatprep.mubr.f32.mxu0 0.0
        %771 = vmatmul.mubr.f32.gmra.mxu0 %v635
        %v772 = vpop.f32.mrf.mxu0
        %v773 = vadd.f32 %v593, %v772
        %v774 = vpop.f32.mrf.mxu0
        %775 = vmatprep.mubr.f32.mxu0 0.0
        %776 = vmatmul.mubr.f32.gmra.mxu0 %v637
        %v777 = vpop.f32.mrf.mxu0
        %v778 = vadd.f32 %v598, %v777
        %v779 = vpop.f32.mrf.mxu0
        %780 = vmatprep.mubr.f32.mxu0 0.0
        %781 = vmatmul.mubr.f32.gmra.mxu0 %v639
        %v782 = vpop.f32.mrf.mxu0
        %v783 = vadd.f32 %v603, %v782
        %v784 = vpop.f32.mrf.mxu0
        %785 = vmatprep.mubr.f32.mxu0 0.0
        %786 = vmatmul.mubr.f32.gmra.mxu0 %v641
        %v787 = vpop.f32.mrf.mxu0
        %v788 = vadd.f32 %v608, %v787
        %v789 = vpop.f32.mrf.mxu0
        %790 = vdwg.mxu0
        %s791 = scalar_lea.vmem %s2, 8
        %v792 = vld [vmem:[%s791] sm:$0xf]
        %v793 = vsel %vm429, %v350, 0
        %v795 = vsel %vm429, %v351, 0
        %v798 = vsel %vm462, %v792, 0
        %800 = vmatprep.subr.mxu0 0.0
        %801 = vmatpush1.msra.mxu0 0.0
        %802 = vmatprep.subr.mxu0 0.0
        %803 = vmatpush1.msra.mxu0 0.0
        %804 = vmatprep.subr.mxu0 0.0
        %805 = vmatpush1.msra.mxu0 0.0
        %806 = vmatprep.subr.mxu0 0.0
        %807 = vmatpush1.msra.mxu0 0.0
        %808 = vmatprep.subr.mxu0 0.0
        %809 = vmatpush1.msra.mxu0 0.0
        %810 = vmatprep.subr.mxu0 0.0
        %811 = vmatpush1.msra.mxu0 0.0
        %812 = vmatprep.subr.mxu0 0.0
        %813 = vmatpush1.msra.mxu0 0.0
        %814 = vmatprep.subr.mxu0 0.0
        %815 = vmatpush1.msra.mxu0 0.0
        %816 = vmatprep.subr.mxu0 0.0
        %817 = vmatpush1.msra.mxu0 0.0
        %818 = vmatprep.subr.mxu0 0.0
        %819 = vmatpush1.msra.mxu0 0.0
        %820 = vmatprep.subr.mxu0 0.0
        %821 = vmatpush1.msra.mxu0 0.0
        %822 = vmatprep.subr.mxu0 0.0
        %823 = vmatpush1.msra.mxu0 0.0
        %824 = vmatprep.subr.mxu0 0.0
        %825 = vmatpush1.msra.mxu0 0.0
        %826 = vmatprep.subr.mxu0 0.0
        %827 = vmatpush1.msra.mxu0 0.0
        %828 = vmatprep.subr.mxu0 0.0
        %829 = vmatpush1.msra.mxu0 0.0
        %830 = vmatprep.subr.mxu0 0.0
        %831 = vmatpush1.msra.mxu0 %v798
        %832 = vmatprep.subr.mxu0 0.0
        %833 = vmatpush2.msra.mxu0 0.0
        %834 = vmatprep.subr.mxu0 0.0
        %835 = vmatpush2.msra.mxu0 0.0
        %836 = vmatprep.subr.mxu0 0.0
        %837 = vmatpush2.msra.mxu0 0.0
        %838 = vmatprep.subr.mxu0 0.0
        %839 = vmatpush2.msra.mxu0 0.0
        %840 = vmatprep.subr.mxu0 0.0
        %841 = vmatpush2.msra.mxu0 0.0
        %842 = vmatprep.subr.mxu0 0.0
        %843 = vmatpush2.msra.mxu0 0.0
        %844 = vmatprep.subr.mxu0 0.0
        %845 = vmatpush2.msra.mxu0 0.0
        %846 = vmatprep.subr.mxu0 0.0
        %847 = vmatpush2.msra.mxu0 0.0
        %848 = vmatprep.subr.mxu0 0.0
        %849 = vmatpush2.msra.mxu0 0.0
        %850 = vmatprep.subr.mxu0 0.0
        %851 = vmatpush2.msra.mxu0 0.0
        %852 = vmatprep.subr.mxu0 0.0
        %853 = vmatpush2.msra.mxu0 0.0
        %854 = vmatprep.subr.mxu0 0.0
        %855 = vmatpush2.msra.mxu0 0.0
        %856 = vmatprep.subr.mxu0 0.0
        %857 = vmatpush2.msra.mxu0 0.0
        %858 = vmatprep.subr.mxu0 0.0
        %859 = vmatpush2.msra.mxu0 0.0
        %860 = vmatprep.subr.mxu0 0.0
        %861 = vmatpush2.msra.mxu0 0.0
        %862 = vmatprep.subr.mxu0 0.0
        %863 = vmatpush2.msra.mxu0 0.0
        %864 = vmatprep.mubr.f32.mxu0 0.0
        %865 = vmatmul.mubr.f32.gmra.mxu0 %v615
        %v866 = vpop.f32.mrf.mxu0
        %v867 = vadd.f32 0.0, %v866
        %v868 = vpop.f32.mrf.mxu0
        %869 = vmatprep.mubr.f32.mxu0 0.0
        %870 = vmatmul.mubr.f32.gmra.mxu0 %v617
        %v871 = vpop.f32.mrf.mxu0
        %v872 = vadd.f32 0.0, %v871
        %v873 = vpop.f32.mrf.mxu0
        %874 = vmatprep.mubr.f32.mxu0 0.0
        %875 = vmatmul.mubr.f32.gmra.mxu0 %v619
        %v876 = vpop.f32.mrf.mxu0
        %v877 = vadd.f32 0.0, %v876
        %v878 = vpop.f32.mrf.mxu0
        %879 = vmatprep.mubr.f32.mxu0 0.0
        %880 = vmatmul.mubr.f32.gmra.mxu0 %v621
        %v881 = vpop.f32.mrf.mxu0
        %v882 = vadd.f32 0.0, %v881
        %v883 = vpop.f32.mrf.mxu0
        %884 = vmatprep.mubr.f32.mxu0 0.0
        %885 = vmatmul.mubr.f32.gmra.mxu0 %v623
        %v886 = vpop.f32.mrf.mxu0
        %v887 = vadd.f32 0.0, %v886
        %v888 = vpop.f32.mrf.mxu0
        %889 = vmatprep.mubr.f32.mxu0 0.0
        %890 = vmatmul.mubr.f32.gmra.mxu0 %v625
        %v891 = vpop.f32.mrf.mxu0
        %v892 = vadd.f32 0.0, %v891
        %v893 = vpop.f32.mrf.mxu0
        %894 = vmatprep.mubr.f32.mxu0 0.0
        %895 = vmatmul.mubr.f32.gmra.mxu0 %v627
        %v896 = vpop.f32.mrf.mxu0
        %v897 = vadd.f32 0.0, %v896
        %v898 = vpop.f32.mrf.mxu0
        %899 = vmatprep.mubr.f32.mxu0 0.0
        %900 = vmatmul.mubr.f32.gmra.mxu0 %v629
        %v901 = vpop.f32.mrf.mxu0
        %v902 = vadd.f32 0.0, %v901
        %v903 = vpop.f32.mrf.mxu0
        %904 = vmatprep.mubr.f32.mxu0 0.0
        %905 = vmatmul.mubr.f32.gmra.mxu0 %v631
        %v906 = vpop.f32.mrf.mxu0
        %v907 = vadd.f32 0.0, %v906
        %v908 = vpop.f32.mrf.mxu0
        %909 = vmatprep.mubr.f32.mxu0 0.0
        %910 = vmatmul.mubr.f32.gmra.mxu0 %v633
        %v911 = vpop.f32.mrf.mxu0
        %v912 = vadd.f32 0.0, %v911
        %v913 = vpop.f32.mrf.mxu0
        %914 = vmatprep.mubr.f32.mxu0 0.0
        %915 = vmatmul.mubr.f32.gmra.mxu0 %v635
        %v916 = vpop.f32.mrf.mxu0
        %v917 = vadd.f32 0.0, %v916
        %v918 = vpop.f32.mrf.mxu0
        %919 = vmatprep.mubr.f32.mxu0 0.0
        %920 = vmatmul.mubr.f32.gmra.mxu0 %v637
        %v921 = vpop.f32.mrf.mxu0
        %v922 = vadd.f32 0.0, %v921
        %v923 = vpop.f32.mrf.mxu0
        %924 = vmatprep.mubr.f32.mxu0 0.0
        %925 = vmatmul.mubr.f32.gmra.mxu0 %v639
        %v926 = vpop.f32.mrf.mxu0
        %v927 = vadd.f32 0.0, %v926
        %v928 = vpop.f32.mrf.mxu0
        %929 = vmatprep.mubr.f32.mxu0 0.0
        %930 = vmatmul.mubr.f32.gmra.mxu0 %v641
        %v931 = vpop.f32.mrf.mxu0
        %v932 = vadd.f32 0.0, %v931
        %v933 = vpop.f32.mrf.mxu0
        %934 = vmatprep.mubr.f32.mxu0 0.0
        %935 = vmatmul.mubr.f32.gmra.mxu0 %v793
        %v936 = vpop.f32.mrf.mxu0
        %v937 = vadd.f32 0.0, %v936
        %v938 = vpop.f32.mrf.mxu0
        %939 = vmatprep.mubr.f32.mxu0 0.0
        %940 = vmatmul.mubr.f32.gmra.mxu0 %v795
        %v941 = vpop.f32.mrf.mxu0
        %v942 = vadd.f32 0.0, %v941
        %v943 = vpop.f32.mrf.mxu0
        %944 = vdwg.mxu0
        %v945 = vadd.f32 %v713, %v867
        %v946 = vadd.f32 %v718, %v872
        %v947 = vadd.f32 %v723, %v877
        %v948 = vadd.f32 %v728, %v882
        %v949 = vadd.f32 %v733, %v887
        %v950 = vadd.f32 %v738, %v892
        %v951 = vadd.f32 %v743, %v897
        %v952 = vadd.f32 %v748, %v902
        %v953 = vadd.f32 %v753, %v907
        %v954 = vadd.f32 %v758, %v912
        %v955 = vadd.f32 %v763, %v917
        %v956 = vadd.f32 %v768, %v922
        %v957 = vadd.f32 %v773, %v927
        %v958 = vadd.f32 %v778, %v932
        %v959 = vadd.f32 %v783, %v937
        %v960 = vadd.f32 %v788, %v942
        %s961 = scalar_lea.vmem %s2, 12
        %v962 = vld [vmem:[%s961] sm:$0xf]
        %v963 = vsel %vm429, %v423, 0
        %v965 = vsel %vm429, %v425, 0
        %v968 = vsel %vm462, %v962, 0
        %970 = vmatprep.subr.mxu0 0.0
        %971 = vmatpush1.msra.mxu0 0.0
        %972 = vmatprep.subr.mxu0 0.0
        %973 = vmatpush1.msra.mxu0 0.0
        %974 = vmatprep.subr.mxu0 0.0
        %975 = vmatpush1.msra.mxu0 0.0
        %976 = vmatprep.subr.mxu0 0.0
        %977 = vmatpush1.msra.mxu0 0.0
        %978 = vmatprep.subr.mxu0 0.0
        %979 = vmatpush1.msra.mxu0 0.0
        %980 = vmatprep.subr.mxu0 0.0
        %981 = vmatpush1.msra.mxu0 0.0
        %982 = vmatprep.subr.mxu0 0.0
        %983 = vmatpush1.msra.mxu0 0.0
        %984 = vmatprep.subr.mxu0 0.0
        %985 = vmatpush1.msra.mxu0 0.0
        %986 = vmatprep.subr.mxu0 0.0
        %987 = vmatpush1.msra.mxu0 0.0
        %988 = vmatprep.subr.mxu0 0.0
        %989 = vmatpush1.msra.mxu0 0.0
        %990 = vmatprep.subr.mxu0 0.0
        %991 = vmatpush1.msra.mxu0 0.0
        %992 = vmatprep.subr.mxu0 0.0
        %993 = vmatpush1.msra.mxu0 0.0
        %994 = vmatprep.subr.mxu0 0.0
        %995 = vmatpush1.msra.mxu0 0.0
        %996 = vmatprep.subr.mxu0 0.0
        %997 = vmatpush1.msra.mxu0 0.0
        %998 = vmatprep.subr.mxu0 0.0
        %999 = vmatpush1.msra.mxu0 0.0
        %1000 = vmatprep.subr.mxu0 0.0
        %1001 = vmatpush1.msra.mxu0 %v968
        %1002 = vmatprep.subr.mxu0 0.0
        %1003 = vmatpush2.msra.mxu0 0.0
        %1004 = vmatprep.subr.mxu0 0.0
        %1005 = vmatpush2.msra.mxu0 0.0
        %1006 = vmatprep.subr.mxu0 0.0
        %1007 = vmatpush2.msra.mxu0 0.0
        %1008 = vmatprep.subr.mxu0 0.0
        %1009 = vmatpush2.msra.mxu0 0.0
        %1010 = vmatprep.subr.mxu0 0.0
        %1011 = vmatpush2.msra.mxu0 0.0
        %1012 = vmatprep.subr.mxu0 0.0
        %1013 = vmatpush2.msra.mxu0 0.0
        %1014 = vmatprep.subr.mxu0 0.0
        %1015 = vmatpush2.msra.mxu0 0.0
        %1016 = vmatprep.subr.mxu0 0.0
        %1017 = vmatpush2.msra.mxu0 0.0
        %1018 = vmatprep.subr.mxu0 0.0
        %1019 = vmatpush2.msra.mxu0 0.0
        %1020 = vmatprep.subr.mxu0 0.0
        %1021 = vmatpush2.msra.mxu0 0.0
        %1022 = vmatprep.subr.mxu0 0.0
        %1023 = vmatpush2.msra.mxu0 0.0
        %1024 = vmatprep.subr.mxu0 0.0
        %1025 = vmatpush2.msra.mxu0 0.0
        %1026 = vmatprep.subr.mxu0 0.0
        %1027 = vmatpush2.msra.mxu0 0.0
        %1028 = vmatprep.subr.mxu0 0.0
        %1029 = vmatpush2.msra.mxu0 0.0
        %1030 = vmatprep.subr.mxu0 0.0
        %1031 = vmatpush2.msra.mxu0 0.0
        %1032 = vmatprep.subr.mxu0 0.0
        %1033 = vmatpush2.msra.mxu0 0.0
        %1034 = vmatprep.mubr.f32.mxu0 0.0
        %1035 = vmatmul.mubr.f32.gmra.mxu0 %v434
        %v1036 = vpop.f32.mrf.mxu0
        %v1037 = vadd.f32 0.0, %v1036
        %v1038 = vpop.f32.mrf.mxu0
        %1039 = vmatprep.mubr.f32.mxu0 0.0
        %1040 = vmatmul.mubr.f32.gmra.mxu0 %v436
        %v1041 = vpop.f32.mrf.mxu0
        %v1042 = vadd.f32 0.0, %v1041
        %v1043 = vpop.f32.mrf.mxu0
        %1044 = vmatprep.mubr.f32.mxu0 0.0
        %1045 = vmatmul.mubr.f32.gmra.mxu0 %v438
        %v1046 = vpop.f32.mrf.mxu0
        %v1047 = vadd.f32 0.0, %v1046
        %v1048 = vpop.f32.mrf.mxu0
        %1049 = vmatprep.mubr.f32.mxu0 0.0
        %1050 = vmatmul.mubr.f32.gmra.mxu0 %v440
        %v1051 = vpop.f32.mrf.mxu0
        %v1052 = vadd.f32 0.0, %v1051
        %v1053 = vpop.f32.mrf.mxu0
        %1054 = vmatprep.mubr.f32.mxu0 0.0
        %1055 = vmatmul.mubr.f32.gmra.mxu0 %v442
        %v1056 = vpop.f32.mrf.mxu0
        %v1057 = vadd.f32 0.0, %v1056
        %v1058 = vpop.f32.mrf.mxu0
        %1059 = vmatprep.mubr.f32.mxu0 0.0
        %1060 = vmatmul.mubr.f32.gmra.mxu0 %v444
        %v1061 = vpop.f32.mrf.mxu0
        %v1062 = vadd.f32 0.0, %v1061
        %v1063 = vpop.f32.mrf.mxu0
        %1064 = vmatprep.mubr.f32.mxu0 0.0
        %1065 = vmatmul.mubr.f32.gmra.mxu0 %v446
        %v1066 = vpop.f32.mrf.mxu0
        %v1067 = vadd.f32 0.0, %v1066
        %v1068 = vpop.f32.mrf.mxu0
        %1069 = vmatprep.mubr.f32.mxu0 0.0
        %1070 = vmatmul.mubr.f32.gmra.mxu0 %v448
        %v1071 = vpop.f32.mrf.mxu0
        %v1072 = vadd.f32 0.0, %v1071
        %v1073 = vpop.f32.mrf.mxu0
        %1074 = vmatprep.mubr.f32.mxu0 0.0
        %1075 = vmatmul.mubr.f32.gmra.mxu0 %v450
        %v1076 = vpop.f32.mrf.mxu0
        %v1077 = vadd.f32 0.0, %v1076
        %v1078 = vpop.f32.mrf.mxu0
        %1079 = vmatprep.mubr.f32.mxu0 0.0
        %1080 = vmatmul.mubr.f32.gmra.mxu0 %v452
        %v1081 = vpop.f32.mrf.mxu0
        %v1082 = vadd.f32 0.0, %v1081
        %v1083 = vpop.f32.mrf.mxu0
        %1084 = vmatprep.mubr.f32.mxu0 0.0
        %1085 = vmatmul.mubr.f32.gmra.mxu0 %v454
        %v1086 = vpop.f32.mrf.mxu0
        %v1087 = vadd.f32 0.0, %v1086
        %v1088 = vpop.f32.mrf.mxu0
        %1089 = vmatprep.mubr.f32.mxu0 0.0
        %1090 = vmatmul.mubr.f32.gmra.mxu0 %v456
        %v1091 = vpop.f32.mrf.mxu0
        %v1092 = vadd.f32 0.0, %v1091
        %v1093 = vpop.f32.mrf.mxu0
        %1094 = vmatprep.mubr.f32.mxu0 0.0
        %1095 = vmatmul.mubr.f32.gmra.mxu0 %v458
        %v1096 = vpop.f32.mrf.mxu0
        %v1097 = vadd.f32 0.0, %v1096
        %v1098 = vpop.f32.mrf.mxu0
        %1099 = vmatprep.mubr.f32.mxu0 0.0
        %1100 = vmatmul.mubr.f32.gmra.mxu0 %v460
        %v1101 = vpop.f32.mrf.mxu0
        %v1102 = vadd.f32 0.0, %v1101
        %v1103 = vpop.f32.mrf.mxu0
        %1104 = vmatprep.mubr.f32.mxu0 0.0
        %1105 = vmatmul.mubr.f32.gmra.mxu0 %v963
        %v1106 = vpop.f32.mrf.mxu0
        %v1107 = vadd.f32 0.0, %v1106
        %v1108 = vpop.f32.mrf.mxu0
        %1109 = vmatprep.mubr.f32.mxu0 0.0
        %1110 = vmatmul.mubr.f32.gmra.mxu0 %v965
        %v1111 = vpop.f32.mrf.mxu0
        %v1112 = vadd.f32 0.0, %v1111
        %v1113 = vpop.f32.mrf.mxu0
        %1114 = vdwg.mxu0
        %v1115 = vadd.f32 %v945, %v1037
        %v1116 = vadd.f32 %v946, %v1042
        %v1117 = vadd.f32 %v947, %v1047
        %v1118 = vadd.f32 %v948, %v1052
        %v1119 = vadd.f32 %v949, %v1057
        %v1120 = vadd.f32 %v950, %v1062
        %v1121 = vadd.f32 %v951, %v1067
        %v1122 = vadd.f32 %v952, %v1072
        %v1123 = vadd.f32 %v953, %v1077
        %v1124 = vadd.f32 %v954, %v1082
        %v1125 = vadd.f32 %v955, %v1087
        %v1126 = vadd.f32 %v956, %v1092
        %v1127 = vadd.f32 %v957, %v1097
        %v1128 = vadd.f32 %v958, %v1102
        %v1129 = vadd.f32 %v959, %v1107
        %v1130 = vadd.f32 %v960, %v1112
        %vm1131 = vcmask 261120
        %1132 = vst.msk [vmem:[%s324] sm:$0xff] %vm1131, %v1115
        %1133 = vst.msk [vmem:[%s324 + $0x8] sm:$0xff] %vm1131, %v1116
        %1134 = vst.msk [vmem:[%s324 + $0x10] sm:$0xff] %vm1131, %v1117
        %1135 = vst.msk [vmem:[%s324 + $0x18] sm:$0xff] %vm1131, %v1118
        %1136 = vst.msk [vmem:[%s324 + $0x20] sm:$0xff] %vm1131, %v1119
        %1137 = vst.msk [vmem:[%s324 + $0x28] sm:$0xff] %vm1131, %v1120
        %1138 = vst.msk [vmem:[%s324 + $0x30] sm:$0xff] %vm1131, %v1121
        %1139 = vst.msk [vmem:[%s324 + $0x38] sm:$0xff] %vm1131, %v1122
        %1140 = vst.msk [vmem:[%s324 + $0x40] sm:$0xff] %vm1131, %v1123
        %1141 = vst.msk [vmem:[%s324 + $0x48] sm:$0xff] %vm1131, %v1124
        %1142 = vst.msk [vmem:[%s324 + $0x50] sm:$0xff] %vm1131, %v1125
        %1143 = vst.msk [vmem:[%s324 + $0x58] sm:$0xff] %vm1131, %v1126
        %1144 = vst.msk [vmem:[%s324 + $0x60] sm:$0xff] %vm1131, %v1127
        %1145 = vst.msk [vmem:[%s324 + $0x68] sm:$0xff] %vm1131, %v1128
        %1146 = vst.msk [vmem:[%s324 + $0x70] sm:$0xff] %vm1131, %v1129
        %1147 = vst.msk [vmem:[%s324 + $0x78] sm:$0xff] %vm1131, %v1130
        %v1148 = vsel %vm1131, %v1115, 0.0
        %v1149 = vsel %vm1131, %v1116, 0.0
        %v1150 = vadd.f32 %v1148, %v1149
        %v1151 = vsel %vm1131, %v1117, 0.0
        %v1152 = vadd.f32 %v1150, %v1151
        %v1153 = vsel %vm1131, %v1118, 0.0
        %v1154 = vadd.f32 %v1152, %v1153
        %v1155 = vsel %vm1131, %v1119, 0.0
        %v1156 = vadd.f32 %v1154, %v1155
        %v1157 = vsel %vm1131, %v1120, 0.0
        %v1158 = vadd.f32 %v1156, %v1157
        %v1159 = vsel %vm1131, %v1121, 0.0
        %v1160 = vadd.f32 %v1158, %v1159
        %v1161 = vsel %vm1131, %v1122, 0.0
        %v1162 = vadd.f32 %v1160, %v1161
        %v1163 = vsel %vm1131, %v1123, 0.0
        %v1164 = vadd.f32 %v1162, %v1163
        %v1165 = vsel %vm1131, %v1124, 0.0
        %v1166 = vadd.f32 %v1164, %v1165
        %v1167 = vsel %vm1131, %v1125, 0.0
        %v1168 = vadd.f32 %v1166, %v1167
        %v1169 = vsel %vm1131, %v1126, 0.0
        %v1170 = vadd.f32 %v1168, %v1169
        %v1171 = vsel %vm1131, %v1127, 0.0
        %v1172 = vadd.f32 %v1170, %v1171
        %v1173 = vsel %vm1131, %v1128, 0.0
        %v1174 = vadd.f32 %v1172, %v1173
        %v1175 = vsel %vm1131, %v1129, 0.0
        %v1176 = vadd.f32 %v1174, %v1175
        %v1177 = vsel %vm1131, %v1130, 0.0
        %v1178 = vadd.f32 %v1176, %v1177
        %v1179 = vrot.slane %v1178, 4
        %v1180 = vadd.f32 %v1178, %v1179
        %v1181 = vrot.slane %v1180, 2
        %v1182 = vadd.f32 %v1180, %v1181
        %v1183 = vrot.slane %v1182, 1
        %v1184 = vadd.f32 %v1182, %v1183
        %v1185 = vmul.f32 %v1115, %v1115
        %v1186 = vmul.f32 %v1116, %v1116
        %v1187 = vmul.f32 %v1117, %v1117
        %v1188 = vmul.f32 %v1118, %v1118
        %v1189 = vmul.f32 %v1119, %v1119
        %v1190 = vmul.f32 %v1120, %v1120
        %v1191 = vmul.f32 %v1121, %v1121
        %v1192 = vmul.f32 %v1122, %v1122
        %v1193 = vmul.f32 %v1123, %v1123
        %v1194 = vmul.f32 %v1124, %v1124
        %v1195 = vmul.f32 %v1125, %v1125
        %v1196 = vmul.f32 %v1126, %v1126
        %v1197 = vmul.f32 %v1127, %v1127
        %v1198 = vmul.f32 %v1128, %v1128
        %v1199 = vmul.f32 %v1129, %v1129
        %v1200 = vmul.f32 %v1130, %v1130
        %v1201 = vsel %vm1131, %v1185, 0.0
        %v1202 = vsel %vm1131, %v1186, 0.0
        %v1203 = vadd.f32 %v1201, %v1202
        %v1204 = vsel %vm1131, %v1187, 0.0
        %v1205 = vadd.f32 %v1203, %v1204
        %v1206 = vsel %vm1131, %v1188, 0.0
        %v1207 = vadd.f32 %v1205, %v1206
        %v1208 = vsel %vm1131, %v1189, 0.0
        %v1209 = vadd.f32 %v1207, %v1208
        %v1210 = vsel %vm1131, %v1190, 0.0
        %v1211 = vadd.f32 %v1209, %v1210
        %v1212 = vsel %vm1131, %v1191, 0.0
        %v1213 = vadd.f32 %v1211, %v1212
        %v1214 = vsel %vm1131, %v1192, 0.0
        %v1215 = vadd.f32 %v1213, %v1214
        %v1216 = vsel %vm1131, %v1193, 0.0
        %v1217 = vadd.f32 %v1215, %v1216
        %v1218 = vsel %vm1131, %v1194, 0.0
        %v1219 = vadd.f32 %v1217, %v1218
        %v1220 = vsel %vm1131, %v1195, 0.0
        %v1221 = vadd.f32 %v1219, %v1220
        %v1222 = vsel %vm1131, %v1196, 0.0
        %v1223 = vadd.f32 %v1221, %v1222
        %v1224 = vsel %vm1131, %v1197, 0.0
        %v1225 = vadd.f32 %v1223, %v1224
        %v1226 = vsel %vm1131, %v1198, 0.0
        %v1227 = vadd.f32 %v1225, %v1226
        %v1228 = vsel %vm1131, %v1199, 0.0
        %v1229 = vadd.f32 %v1227, %v1228
        %v1230 = vsel %vm1131, %v1200, 0.0
        %v1231 = vadd.f32 %v1229, %v1230
        %v1232 = vrot.slane %v1231, 4
        %v1233 = vadd.f32 %v1231, %v1232
        %v1234 = vrot.slane %v1233, 2
        %v1235 = vadd.f32 %v1233, %v1234
        %v1236 = vrot.slane %v1235, 1
        %v1237 = vadd.f32 %v1235, %v1236
        %vm1238 = vcmask 1040384
        %v1239 = vsel %vm1238, %v1184, %v1237
        %vm1240 = vcmask 254976
        %1241 = vst.msk [vmem:[%s281] sm:$0x3] %vm1240, %v1239
        %s1242 = smul.u32 16, %s24
        %p1243 = scmp.lt.s32.totalorder %s23, 1
        %s1244 = scalar_select %p1243, %s23, 1
        %p1245 = scmp.lt.s32.totalorder %s1242, 31
        %s1246 = scalar_select %p1245, %s1242, 31
        %s1247 = smul.addr %s1244, 32
        %s1248 = sadd.s32 %s1246, %s1247
        %s1249 = smul.addr %s1248, 8
        %s1250 = scalar_lea.vmem %s3, %s1249
        %s1251 = sand.u32 %s150, 1
        %s1252 = scalar_lea.sflag [#allocation3], %s1251
        %s1253 = sand.u32 %s150, 1
        %s1254 = smul.addr %s1253, 2
        %s1255 = scalar_lea.vmem [#allocation2], %s1254
        // Predicated region
        $region33: #{tpu_custom_call.1} parent=31 // pred_check
          %p1256 = pneg %p132
        $region34: #{tpu_custom_call.1} parent=31 // pred_check_branch
          %1258 = sbr.rel (%p1256) target = $region36
        $region35: #{tpu_custom_call.1} parent=31 // pred_region
          %s1259 = smul.u32 16, %s24
        $region36: #{tpu_custom_call.1} parent=31 // pred_fallthru
          _
        // Predicated region
        $region37: #{tpu_custom_call.1} parent=31 // pred_check
          %p1260 = pneg %p160
        $region38: #{tpu_custom_call.1} parent=31 // pred_check_branch
          %1262 = sbr.rel (%p1260) target = $region40
        $region39: #{tpu_custom_call.1} parent=31 // pred_region
          %s1264 = ssub.s32 32, 32
          %1265 = vsyncadd %s1252, %s1264
          %s1266 = smul.addr %s23, 2
          %s1267 = sadd.s32 %s24, %s1266
          %s1268 = smul.addr %s1267, 32
          %s1269 = scalar_lea.hbm %s4, %s1268
          %s1271 = sshll.u32 %s1255, 4
          %s1272 = int_to_ptr.vmem [resolvable:$true] %s1271
          %1274 = dma.vmem_to_hbm [thread:$0]  %s1272, 32, %s1269, %s1252
        $region40: #{tpu_custom_call.1} parent=31 // pred_fallthru
          _
      $region32: #{tpu_custom_call.1} parent=5 // pred_fallthru
        _
      %p1275 = scmp.le.s32.totalorder 2, %s14
      // Predicated region
      $region41: #{tpu_custom_call.1} parent=5 // pred_check
        %p1276 = pneg %p1275
      $region42: #{tpu_custom_call.1} parent=5 // pred_check_branch
        %1278 = sbr.rel (%p1276) target = $region44
      $region43: #{tpu_custom_call.1} parent=5 // pred_region
        %s1279 = ssub.s32 %s14, 2
        // Predicated region
        $region45: #{tpu_custom_call.1} parent=43 // pred_check
          %p1280 = pneg %p138
        $region46: #{tpu_custom_call.1} parent=43 // pred_check_branch
          %1282 = sbr.rel (%p1280) target = $region48
        $region47: #{tpu_custom_call.1} parent=43 // pred_region
          %s1283 = smul.u32 16, %s26
          %p1284 = scmp.lt.s32.totalorder %s25, 1
          %s1285 = scalar_select %p1284, %s25, 1
          %p1286 = scmp.lt.s32.totalorder %s1283, 31
          %s1287 = scalar_select %p1286, %s1283, 31
          %s1288 = smul.addr %s1285, 32
          %s1289 = sadd.s32 %s1287, %s1288
          %s1290 = smul.addr %s1289, 8
          %s1291 = scalar_lea.vmem %s3, %s1290
        $region48: #{tpu_custom_call.1} parent=43 // pred_fallthru
          _
        // Predicated region
        $region49: #{tpu_custom_call.1} parent=43 // pred_check
          %p1292 = pneg %p166
        $region50: #{tpu_custom_call.1} parent=43 // pred_check_branch
          %1294 = sbr.rel (%p1292) target = $region52
        $region51: #{tpu_custom_call.1} parent=43 // pred_region
          %s1295 = sand.u32 %s151, 1
          %s1296 = scalar_lea.sflag [#allocation3], %s1295
          %s1297 = sand.u32 %s151, 1
          %s1298 = smul.addr %s1297, 2
          %s1299 = scalar_lea.vmem [#allocation2], %s1298
          %1300 = dma.done %s1296, 32
        $region52: #{tpu_custom_call.1} parent=43 // pred_fallthru
          _
      $region44: #{tpu_custom_call.1} parent=5 // pred_fallthru
        _
    $region6: #{tpu_custom_call.1} parent=1 // loop_footer
      %s18 = sadd.s32 1, %s14
    $region7: #{tpu_custom_call.1} parent=1 // loop_footer_branch
      %13 = sbr.rel target = $region3
    $region8: #{tpu_custom_call.1} parent=1 // loop_exit
      _
    %1301 = vsyncpa [#allocation3], 1
    %s1302 = scalar_lea.sflag [#allocation3], 1
    %1303 = vsyncpa %s1302, 1

</llo_original>
